<compile_context>
chip_gen: v5e
topology: v5e:2x2
jax: 0.10.0
libtpu: 0.0.40
codegen_flags: <defaults>
</compile_context>

<pallas_src>
import functools

import jax
import jax.numpy as jnp
from jax.experimental import pallas as pl
from jax.experimental.pallas import tpu as pltpu


def _mlp_kernel(x_ref,
                w1_ref, b1_ref,
                w2_ref, b2_ref,
                w3_ref, b3_ref,
                w4_ref, b4_ref,
                o_ref):
    """Fused 4-layer MLP: relu / relu / relu / sigmoid.

    x_ref:  (bb, 89)  f32 batch tile (cast to bf16 in-kernel).
    w*_ref: (in, out) bf16 weights; b*_ref: (1, out) f32 biases (VMEM-resident).
    o_ref:  (bb, 1)   f32 sigmoid outputs for this tile.
    """
    x = x_ref[...].astype(jnp.bfloat16)

    # fc1 + ReLU  (bf16 MXU, f32 accumulate)
    h = jnp.dot(x, w1_ref[...], preferred_element_type=jnp.float32)
    h = jnp.maximum(h + b1_ref[...], 0.0)

    # fc2 + ReLU  (dropout -> identity in eval mode)
    h = jnp.dot(h.astype(jnp.bfloat16), w2_ref[...],
                preferred_element_type=jnp.float32)
    h = jnp.maximum(h + b2_ref[...], 0.0)

    # fc3 + ReLU  (dropout -> identity in eval mode)
    h = jnp.dot(h.astype(jnp.bfloat16), w3_ref[...],
                preferred_element_type=jnp.float32)
    h = jnp.maximum(h + b3_ref[...], 0.0)             # (bb, 64) f32

    # fc4 + sigmoid: (bb, 64) @ (64, 1) -> (bb, 1).
    logits = jnp.dot(h.astype(jnp.bfloat16), w4_ref[...],
                     preferred_element_type=jnp.float32)
    logits = logits + b4_ref[...]                      # (1, 1) broadcast
    o_ref[...] = jax.nn.sigmoid(logits).astype(o_ref.dtype)


def _round_up(n, m):
    return ((n + m - 1) // m) * m


@functools.partial(jax.jit, static_argnames=("block_b",))
def network_anomaly_forward(x, params, *, block_b=2048):
    """x: (B, input_size) float32.  params from prepare_params().
    Returns (B, 1) float32 probabilities in [0, 1]."""
    w1, b1, w2, b2, w3, b3, w4, b4 = params
    B, F = x.shape

    if B <= 128:
        # Single small block: any multiple-of-8 row tile works.
        bb = _round_up(B, 8)
    else:
        # Guarantee >= 2 grid steps so the v7x megacore can shard the batch
        # axis across both TensorCores; keep the tile a multiple of 128 rows.
        assert block_b % 128 == 0, "block_b must be a multiple of 128"
        half = _round_up((B + 1) // 2, 128)
        bb = min(block_b, half)
    n_blocks = (B + bb - 1) // bb   # cdiv: last block may be partial.

    # Constant-index full-array blocks -> fetched once, stay VMEM-resident.
    def full_spec(arr):
        nd = arr.ndim
        return pl.BlockSpec(arr.shape, lambda i, _nd=nd: (0,) * _nd)

    out = pl.pallas_call(
        _mlp_kernel,
        out_shape=jax.ShapeDtypeStruct((B, 1), jnp.float32),
        grid_spec=pltpu.PrefetchScalarGridSpec(
            num_scalar_prefetch=0,
            grid=(n_blocks,),
            in_specs=[
                pl.BlockSpec((bb, F), lambda i: (i, 0)),   # x tile (f32)
                full_spec(w1), full_spec(b1),
                full_spec(w2), full_spec(b2),
                full_spec(w3), full_spec(b3),
                full_spec(w4), full_spec(b4),
            ],
            out_specs=pl.BlockSpec((bb, 1), lambda i: (i, 0)),
        ),
        compiler_params=pltpu.CompilerParams(
            dimension_semantics=("parallel",)),
    )(x, w1, b1, w2, b2, w3, b3, w4, b4)
    return out


def init_params(key, input_size=89):
    """f32 params matching nn.Linear shapes (weights stored as (in, out))."""
    sizes = [(input_size, 256), (256, 128), (128, 64), (64, 1)]
    params = []
    for fan_in, fan_out in sizes:
        kw, kb, key = jax.random.split(key, 3)
        bound = 1.0 / float(fan_in) ** 0.5
        # nn.Linear stores (out, in); we store the transposed (in, out) layout.
        w = jax.random.uniform(kw, (fan_in, fan_out), jnp.float32, -bound, bound)
        b = jax.random.uniform(kb, (1, fan_out), jnp.float32, -bound, bound)
        params += [w, b]
    return tuple(params)


def prepare_params(params):
    """One-time kernel prep (hoisted out of the per-call forward):
    bf16 weights (halves DMA/VMEM, native MXU path), f32 biases."""
    w1, b1, w2, b2, w3, b3, w4, b4 = params
    bf = lambda w: w.astype(jnp.bfloat16)
    return (bf(w1), b1, bf(w2), b2, bf(w3), b3, bf(w4), b4)


def reference_forward(x, params):
    """Pure-JAX f32 reference (eval-mode dropout = identity)."""
    w1, b1, w2, b2, w3, b3, w4, b4 = params
    h = jnp.maximum(x @ w1 + b1, 0.0)
    h = jnp.maximum(h @ w2 + b2, 0.0)
    h = jnp.maximum(h @ w3 + b3, 0.0)
    return jax.nn.sigmoid(h @ w4 + b4)


if __name__ == "__main__":
    key = jax.random.PRNGKey(0)
    k_x1, k_x2, k_p = jax.random.split(key, 3)

    input_size = 89
    params_f32 = init_params(k_p, input_size=input_size)
    params = prepare_params(params_f32)   # bf16 weights, converted once

    # Small batch: single-block path.
    x_small = jax.random.normal(k_x1, (8, input_size), dtype=jnp.float32)
    out_small = jax.block_until_ready(network_anomaly_forward(x_small, params))
    assert out_small.shape == (8, 1)
    assert bool(jnp.all((out_small >= 0.0) & (out_small <= 1.0)))
    ref_small = reference_forward(x_small, params_f32)
    assert bool(jnp.max(jnp.abs(out_small - ref_small)) < 5e-2)

    # Larger, non-divisible batch: 2-step grid with a partial last block
    # (exercises the multi-block path, edge handling, and both-TC sharding
    # on v7x).
    x_large = jax.random.normal(k_x2, (300, input_size), dtype=jnp.float32)
    out_large = jax.block_until_ready(network_anomaly_forward(x_large, params))
    assert out_large.shape == (300, 1)
    assert bool(jnp.all((out_large >= 0.0) & (out_large <= 1.0)))
    ref_large = reference_forward(x_large, params_f32)
    assert bool(jnp.max(jnp.abs(out_large - ref_large)) < 5e-2)

    print("KERNEL_OK")
</pallas_src>

<mosaic_0001>
module attributes {stable_mosaic.version = 11 : i64} {
  func.func @_mlp_kernel(%arg0: i32, %arg1: memref<8x89xf32, #tpu.memory_space<vmem>>, %arg2: memref<89x256xbf16, #tpu.memory_space<vmem>>, %arg3: memref<1x256xf32, #tpu.memory_space<vmem>>, %arg4: memref<256x128xbf16, #tpu.memory_space<vmem>>, %arg5: memref<1x128xf32, #tpu.memory_space<vmem>>, %arg6: memref<128x64xbf16, #tpu.memory_space<vmem>>, %arg7: memref<1x64xf32, #tpu.memory_space<vmem>>, %arg8: memref<64x1xbf16, #tpu.memory_space<vmem>>, %arg9: memref<1x1xf32, #tpu.memory_space<vmem>>, %arg10: memref<8x1xf32, #tpu.memory_space<vmem>>) attributes {dimension_semantics = [#tpu.dimension_semantics<parallel>], iteration_bounds = array<i64: 1>, scalar_prefetch = 0 : i64, scratch_operands = 0 : i64, tpu.core_type = #tpu.core_type<tc>, window_params = [{transform_indices = @transform_0, window_bounds = array<i64: 8, 89>}, {pipeline_mode = #tpu.pipeline_mode<synchronous>, transform_indices = @transform_1, window_bounds = array<i64: 89, 256>}, {pipeline_mode = #tpu.pipeline_mode<synchronous>, transform_indices = @transform_2, window_bounds = array<i64: 1, 256>}, {pipeline_mode = #tpu.pipeline_mode<synchronous>, transform_indices = @transform_3, window_bounds = array<i64: 256, 128>}, {pipeline_mode = #tpu.pipeline_mode<synchronous>, transform_indices = @transform_4, window_bounds = array<i64: 1, 128>}, {pipeline_mode = #tpu.pipeline_mode<synchronous>, transform_indices = @transform_5, window_bounds = array<i64: 128, 64>}, {pipeline_mode = #tpu.pipeline_mode<synchronous>, transform_indices = @transform_6, window_bounds = array<i64: 1, 64>}, {pipeline_mode = #tpu.pipeline_mode<synchronous>, transform_indices = @transform_7, window_bounds = array<i64: 64, 1>}, {pipeline_mode = #tpu.pipeline_mode<synchronous>, transform_indices = @transform_8, window_bounds = array<i64: 1, 1>}, {transform_indices = @transform_9, window_bounds = array<i64: 8, 1>}]} {
    %c0 = arith.constant 0 : index
    %c0_0 = arith.constant 0 : index
    %0 = vector.load %arg1[%c0, %c0_0] : memref<8x89xf32, #tpu.memory_space<vmem>>, vector<8x89xf32>
    %1 = arith.truncf %0 : vector<8x89xf32> to vector<8x89xbf16>
    %c0_1 = arith.constant 0 : index
    %c0_2 = arith.constant 0 : index
    %2 = vector.load %arg2[%c0_1, %c0_2] : memref<89x256xbf16, #tpu.memory_space<vmem>>, vector<89x256xbf16>
    %cst = arith.constant dense<0.000000e+00> : vector<8x256xf32>
    %3 = tpu.matmul %1, %2, %cst {dimension_numbers = #tpu.dot_dimension_numbers<[1], [0], [0], [1], [0, 0, 1, 1], [], []>} : vector<8x89xbf16>, vector<89x256xbf16>, vector<8x256xf32> -> vector<8x256xf32>
    %c0_3 = arith.constant 0 : index
    %c0_4 = arith.constant 0 : index
    %4 = vector.load %arg3[%c0_3, %c0_4] : memref<1x256xf32, #tpu.memory_space<vmem>>, vector<1x256xf32>
    %5 = vector.broadcast %4 : vector<1x256xf32> to vector<8x256xf32>
    %6 = arith.addf %3, %5 : vector<8x256xf32>
    %cst_5 = arith.constant 0.000000e+00 : f32
    %7 = vector.broadcast %cst_5 : f32 to vector<8x256xf32>
    %8 = arith.maximumf %6, %7 : vector<8x256xf32>
    %9 = arith.truncf %8 : vector<8x256xf32> to vector<8x256xbf16>
    %c0_6 = arith.constant 0 : index
    %c0_7 = arith.constant 0 : index
    %10 = vector.load %arg4[%c0_6, %c0_7] : memref<256x128xbf16, #tpu.memory_space<vmem>>, vector<256x128xbf16>
    %cst_8 = arith.constant dense<0.000000e+00> : vector<8x128xf32>
    %11 = tpu.matmul %9, %10, %cst_8 {dimension_numbers = #tpu.dot_dimension_numbers<[1], [0], [0], [1], [0, 0, 1, 1], [], []>} : vector<8x256xbf16>, vector<256x128xbf16>, vector<8x128xf32> -> vector<8x128xf32>
    %c0_9 = arith.constant 0 : index
    %c0_10 = arith.constant 0 : index
    %12 = vector.load %arg5[%c0_9, %c0_10] : memref<1x128xf32, #tpu.memory_space<vmem>>, vector<1x128xf32>
    %13 = vector.broadcast %12 : vector<1x128xf32> to vector<8x128xf32>
    %14 = arith.addf %11, %13 : vector<8x128xf32>
    %cst_11 = arith.constant 0.000000e+00 : f32
    %15 = vector.broadcast %cst_11 : f32 to vector<8x128xf32>
    %16 = arith.maximumf %14, %15 : vector<8x128xf32>
    %17 = arith.truncf %16 : vector<8x128xf32> to vector<8x128xbf16>
    %c0_12 = arith.constant 0 : index
    %c0_13 = arith.constant 0 : index
    %18 = vector.load %arg6[%c0_12, %c0_13] : memref<128x64xbf16, #tpu.memory_space<vmem>>, vector<128x64xbf16>
    %cst_14 = arith.constant dense<0.000000e+00> : vector<8x64xf32>
    %19 = tpu.matmul %17, %18, %cst_14 {dimension_numbers = #tpu.dot_dimension_numbers<[1], [0], [0], [1], [0, 0, 1, 1], [], []>} : vector<8x128xbf16>, vector<128x64xbf16>, vector<8x64xf32> -> vector<8x64xf32>
    %c0_15 = arith.constant 0 : index
    %c0_16 = arith.constant 0 : index
    %20 = vector.load %arg7[%c0_15, %c0_16] : memref<1x64xf32, #tpu.memory_space<vmem>>, vector<1x64xf32>
    %21 = vector.broadcast %20 : vector<1x64xf32> to vector<8x64xf32>
    %22 = arith.addf %19, %21 : vector<8x64xf32>
    %cst_17 = arith.constant 0.000000e+00 : f32
    %23 = vector.broadcast %cst_17 : f32 to vector<8x64xf32>
    %24 = arith.maximumf %22, %23 : vector<8x64xf32>
    %25 = arith.truncf %24 : vector<8x64xf32> to vector<8x64xbf16>
    %c0_18 = arith.constant 0 : index
    %c0_19 = arith.constant 0 : index
    %26 = vector.load %arg8[%c0_18, %c0_19] : memref<64x1xbf16, #tpu.memory_space<vmem>>, vector<64x1xbf16>
    %cst_20 = arith.constant dense<0.000000e+00> : vector<8x1xf32>
    %27 = tpu.matmul %25, %26, %cst_20 {dimension_numbers = #tpu.dot_dimension_numbers<[1], [0], [0], [1], [0, 0, 1, 1], [], []>} : vector<8x64xbf16>, vector<64x1xbf16>, vector<8x1xf32> -> vector<8x1xf32>
    %c0_21 = arith.constant 0 : index
    %c0_22 = arith.constant 0 : index
    %28 = vector.load %arg9[%c0_21, %c0_22] : memref<1x1xf32, #tpu.memory_space<vmem>>, vector<1x1xf32>
    %29 = vector.broadcast %28 : vector<1x1xf32> to vector<8x1xf32>
    %30 = arith.addf %27, %29 : vector<8x1xf32>
    %31 = arith.negf %30 : vector<8x1xf32>
    %32 = math.exp %31 : vector<8x1xf32>
    %cst_23 = arith.constant 1.000000e+00 : f32
    %33 = vector.broadcast %cst_23 : f32 to vector<8x1xf32>
    %34 = arith.addf %33, %32 : vector<8x1xf32>
    %35 = arith.divf %33, %34 : vector<8x1xf32>
    %c0_24 = arith.constant 0 : index
    %c0_25 = arith.constant 0 : index
    %36 = vector.load %arg10[%c0_24, %c0_25] : memref<8x1xf32, #tpu.memory_space<vmem>>, vector<8x1xf32>
    tpu.vector_store %arg10[%c0_24, %c0_25], %35 {strides = array<i32>} : memref<8x1xf32, #tpu.memory_space<vmem>>, vector<8x1xf32>,
    return
  }
  func.func @transform_0(%arg0: i32) -> (i32, i32) {
    %c0_i32 = arith.constant 0 : i32
    %c0_i32_0 = arith.constant 0 : i32
    return %arg0, %c0_i32 : i32, i32
  }
  func.func @transform_1(%arg0: i32) -> (i32, i32) {
    %c0_i32 = arith.constant 0 : i32
    %c0_i32_0 = arith.constant 0 : i32
    %c0_i32_1 = arith.constant 0 : i32
    return %c0_i32, %c0_i32_0 : i32, i32
  }
  func.func @transform_2(%arg0: i32) -> (i32, i32) {
    %c0_i32 = arith.constant 0 : i32
    %c0_i32_0 = arith.constant 0 : i32
    %c0_i32_1 = arith.constant 0 : i32
    return %c0_i32, %c0_i32_0 : i32, i32
  }
  func.func @transform_3(%arg0: i32) -> (i32, i32) {
    %c0_i32 = arith.constant 0 : i32
    %c0_i32_0 = arith.constant 0 : i32
    %c0_i32_1 = arith.constant 0 : i32
    return %c0_i32, %c0_i32_0 : i32, i32
  }
  func.func @transform_4(%arg0: i32) -> (i32, i32) {
    %c0_i32 = arith.constant 0 : i32
    %c0_i32_0 = arith.constant 0 : i32
    %c0_i32_1 = arith.constant 0 : i32
    return %c0_i32, %c0_i32_0 : i32, i32
  }
  func.func @transform_5(%arg0: i32) -> (i32, i32) {
    %c0_i32 = arith.constant 0 : i32
    %c0_i32_0 = arith.constant 0 : i32
    %c0_i32_1 = arith.constant 0 : i32
    return %c0_i32, %c0_i32_0 : i32, i32
  }
  func.func @transform_6(%arg0: i32) -> (i32, i32) {
    %c0_i32 = arith.constant 0 : i32
    %c0_i32_0 = arith.constant 0 : i32
    %c0_i32_1 = arith.constant 0 : i32
    return %c0_i32, %c0_i32_0 : i32, i32
  }
  func.func @transform_7(%arg0: i32) -> (i32, i32) {
    %c0_i32 = arith.constant 0 : i32
    %c0_i32_0 = arith.constant 0 : i32
    %c0_i32_1 = arith.constant 0 : i32
    return %c0_i32, %c0_i32_0 : i32, i32
  }
  func.func @transform_8(%arg0: i32) -> (i32, i32) {
    %c0_i32 = arith.constant 0 : i32
    %c0_i32_0 = arith.constant 0 : i32
    %c0_i32_1 = arith.constant 0 : i32
    return %c0_i32, %c0_i32_0 : i32, i32
  }
  func.func @transform_9(%arg0: i32) -> (i32, i32) {
    %c0_i32 = arith.constant 0 : i32
    %c0_i32_0 = arith.constant 0 : i32
    return %arg0, %c0_i32 : i32, i32
  }
}

</mosaic_0001>

<llo_original>
// kernel: network_anomaly_forward.1
$region0: #{network_anomaly_forward.1}
  #allocation0 [shape = 'u32[]', space=smem, size = 0x4, offset = 0x4, fixed_abs, tag = 'smem constant byte address 0x4 - core index']
  #allocation1 [shape = 'u32[72,128]{1,0:T(1,128)}', space=vmem, size = 0x9000, scoped, tag = 'internal scratch']
  #allocation2 [shape = 'f32[1,1]{1,0:T(1,128)S(1)}', space=vmem, size = 0x200, scoped, tag = 'scoped memory for network_anomaly_forward.1']
  %s0 = inlined_call_operand.hbm [shape: f32[8,89], index: 0, kind: input, shape index: {}]
  %s1 = inlined_call_operand.vmem [shape: bf16[89,256], index: 1, kind: input, shape index: {}]
  %s2 = inlined_call_operand.vmem [shape: f32[1,256], index: 2, kind: input, shape index: {}]
  %s3 = inlined_call_operand.hbm [shape: bf16[256,128], index: 3, kind: input, shape index: {}]
  %s4 = inlined_call_operand.vmem [shape: f32[1,128], index: 4, kind: input, shape index: {}]
  %s5 = inlined_call_operand.vmem [shape: bf16[128,64], index: 5, kind: input, shape index: {}]
  %s6 = inlined_call_operand.vmem [shape: f32[1,64], index: 6, kind: input, shape index: {}]
  %s7 = inlined_call_operand.vmem [shape: bf16[64,1], index: 7, kind: input, shape index: {}]
  %s8 = inlined_call_operand.<no memory space> [shape: f32[1,1], index: 8, kind: input, shape index: {}]
  %s9 = inlined_call_operand.vmem [shape: f32[8,1], index: 9, kind: output, shape index: {}]
  %s10 = sld [smem:[#allocation0]]
  $region54: #{network_anomaly_forward.1} parent=0
    _
  %s12 = ssub.s32 1, %s10
  %s13 = scalar_select 0, %s12, %s10
  %v14 = vstv %s8
  %15 = vst [vmem:[#allocation2] sm:$0x1] %v14
  $region1: #{network_anomaly_forward.1} parent=0
    #allocation3 [shape = 'u8[4096]{0}', space=vmem, size = 0x1000, scoped, tag = 'input window, operand 0, single buffered']
    #allocation4 [shape = 's32[1]{0}', space=sflag, size = 0x4, scoped, tag = 'scoped memory for network_anomaly_forward.1']
    #allocation5 [shape = 'u8[65536]{0}', space=vmem, size = 0x10000, scoped, tag = 'input window, operand 3, single buffered']
    #allocation6 [shape = 's32[1]{0}', space=sflag, size = 0x4, scoped, tag = 'scoped memory for network_anomaly_forward.1']
    %16 = vsyncpa [#allocation4], 0
    %17 = vsyncpa [#allocation6], 0
    // Predicated region
    $region2: #{network_anomaly_forward.1} parent=1 // pred_check
      _
    $region3: #{network_anomaly_forward.1} parent=1 // pred_check_branch
      %19 = sbr.rel (0) target = $region5
    $region4: #{network_anomaly_forward.1} parent=1 // pred_region
      %21 = vsyncadd [#allocation4], 0
      %s23 = sshll.u32 %s0, 4
      %s24 = int_to_ptr.hbm [resolvable:$true] %s23
      %s25 = sshll.u32 [#allocation3], 4
      %s26 = int_to_ptr.vmem [resolvable:$true] %s25
      %28 = dma.hbm_to_vmem [thread:$0]  %s24, 128, %s26, [#allocation4]
    $region5: #{network_anomaly_forward.1} parent=1 // pred_fallthru
      _
    // Predicated region
    $region6: #{network_anomaly_forward.1} parent=1 // pred_check
      _
    $region7: #{network_anomaly_forward.1} parent=1 // pred_check_branch
      %30 = sbr.rel (0) target = $region9
    $region8: #{network_anomaly_forward.1} parent=1 // pred_region
      _
    $region9: #{network_anomaly_forward.1} parent=1 // pred_fallthru
      _
    // Predicated region
    $region10: #{network_anomaly_forward.1} parent=1 // pred_check
      _
    $region11: #{network_anomaly_forward.1} parent=1 // pred_check_branch
      %32 = sbr.rel (0) target = $region13
    $region12: #{network_anomaly_forward.1} parent=1 // pred_region
      _
    $region13: #{network_anomaly_forward.1} parent=1 // pred_fallthru
      _
    // Predicated region
    $region14: #{network_anomaly_forward.1} parent=1 // pred_check
      _
    $region15: #{network_anomaly_forward.1} parent=1 // pred_check_branch
      %34 = sbr.rel (0) target = $region17
    $region16: #{network_anomaly_forward.1} parent=1 // pred_region
      %36 = vsyncadd [#allocation6], 0
      %s37 = sshll.u32 %s3, 4
      %s38 = int_to_ptr.hbm [resolvable:$true] %s37
      %s39 = sshll.u32 [#allocation5], 4
      %s40 = int_to_ptr.vmem [resolvable:$true] %s39
      %45 = dma.hbm_to_vmem [thread:$0]  %s38, 2048, %s40, [#allocation6], 64, 64, 4
    $region17: #{network_anomaly_forward.1} parent=1 // pred_fallthru
      _
    // Predicated region
    $region18: #{network_anomaly_forward.1} parent=1 // pred_check
      _
    $region19: #{network_anomaly_forward.1} parent=1 // pred_check_branch
      %47 = sbr.rel (0) target = $region21
    $region20: #{network_anomaly_forward.1} parent=1 // pred_region
      _
    $region21: #{network_anomaly_forward.1} parent=1 // pred_fallthru
      _
    // Predicated region
    $region22: #{network_anomaly_forward.1} parent=1 // pred_check
      _
    $region23: #{network_anomaly_forward.1} parent=1 // pred_check_branch
      %49 = sbr.rel (0) target = $region25
    $region24: #{network_anomaly_forward.1} parent=1 // pred_region
      _
    $region25: #{network_anomaly_forward.1} parent=1 // pred_fallthru
      _
    // Predicated region
    $region26: #{network_anomaly_forward.1} parent=1 // pred_check
      _
    $region27: #{network_anomaly_forward.1} parent=1 // pred_check_branch
      %51 = sbr.rel (0) target = $region29
    $region28: #{network_anomaly_forward.1} parent=1 // pred_region
      _
    $region29: #{network_anomaly_forward.1} parent=1 // pred_fallthru
      _
    // Predicated region
    $region30: #{network_anomaly_forward.1} parent=1 // pred_check
      _
    $region31: #{network_anomaly_forward.1} parent=1 // pred_check_branch
      %53 = sbr.rel (0) target = $region33
    $region32: #{network_anomaly_forward.1} parent=1 // pred_region
      _
    $region33: #{network_anomaly_forward.1} parent=1 // pred_fallthru
      _
    // Predicated region
    $region34: #{network_anomaly_forward.1} parent=1 // pred_check
      _
    $region35: #{network_anomaly_forward.1} parent=1 // pred_check_branch
      %55 = sbr.rel (0) target = $region37
    $region36: #{network_anomaly_forward.1} parent=1 // pred_region
      _
    $region37: #{network_anomaly_forward.1} parent=1 // pred_fallthru
      _
    // Predicated region
    $region38: #{network_anomaly_forward.1} parent=1 // pred_check
      _
    $region39: #{network_anomaly_forward.1} parent=1 // pred_check_branch
      %57 = sbr.rel (0) target = $region41
    $region40: #{network_anomaly_forward.1} parent=1 // pred_region
      %59 = dma.done [#allocation4], 128
    $region41: #{network_anomaly_forward.1} parent=1 // pred_fallthru
      _
    // Predicated region
    $region42: #{network_anomaly_forward.1} parent=1 // pred_check
      _
    $region43: #{network_anomaly_forward.1} parent=1 // pred_check_branch
      %61 = sbr.rel (0) target = $region45
    $region44: #{network_anomaly_forward.1} parent=1 // pred_region
      %63 = dma.done [#allocation6], 2048
    $region45: #{network_anomaly_forward.1} parent=1 // pred_fallthru
      _
    %v65 = vld [vmem:[#allocation3] sm:$0xff]
    %v66 = vpack.c.bf16 %v65, %v65
    %v67 = vld [vmem:[%s1] sm:$0xff]
    %v68 = vld [vmem:[%s1 + $0x8] sm:$0xff]
    %v69 = vld [vmem:[%s1 + $0x10] sm:$0xff]
    %v70 = vld [vmem:[%s1 + $0x18] sm:$0xff]
    %v71 = vld [vmem:[%s1 + $0x20] sm:$0xff]
    %v72 = vld [vmem:[%s1 + $0x28] sm:$0xff]
    %v73 = vld [vmem:[%s1 + $0x30] sm:$0xff]
    %v74 = vld [vmem:[%s1 + $0x38] sm:$0xff]
    %v75 = vld [vmem:[%s1 + $0x40] sm:$0xff]
    %v76 = vld [vmem:[%s1 + $0x48] sm:$0xff]
    %v77 = vld [vmem:[%s1 + $0x50] sm:$0xff]
    %v78 = vld [vmem:[%s1 + $0x58] sm:$0x11]
    %v79 = vld [vmem:[%s2] sm:$0x3]
    %v81 = vperm.slane %v79, 0
    %v82 = vperm.slane %v79, 1
    %v97 = vunpack.c.l.b16 %v67
    %v98 = vunpack.c.h.b16 %v67
    %v99 = vunpack.c.l.b16 %v68
    %v100 = vunpack.c.h.b16 %v68
    %v101 = vunpack.c.l.b16 %v69
    %v102 = vunpack.c.h.b16 %v69
    %v103 = vunpack.c.l.b16 %v70
    %v104 = vunpack.c.h.b16 %v70
    %v105 = vunpack.c.l.b16 %v71
    %v106 = vunpack.c.h.b16 %v71
    %v107 = vunpack.c.l.b16 %v72
    %v108 = vunpack.c.h.b16 %v72
    %v109 = vunpack.c.l.b16 %v73
    %v110 = vunpack.c.h.b16 %v73
    %v111 = vunpack.c.l.b16 %v74
    %v112 = vunpack.c.h.b16 %v74
    %v113 = vunpack.c.l.b16 %v75
    %v114 = vunpack.c.h.b16 %v75
    %v115 = vunpack.c.l.b16 %v76
    %v116 = vunpack.c.h.b16 %v76
    %v117 = vunpack.c.l.b16 %v77
    %v118 = vunpack.c.h.b16 %v77
    %v119 = vunpack.c.l.b16 %v78
    %v120 = vunpack.c.h.b16 %v78
    %v121 = vpack.c.b16 %v99, %v97
    %v122 = vpack.c.b16 %v100, %v98
    %v123 = vpack.c.b16 %v103, %v101
    %v124 = vpack.c.b16 %v104, %v102
    %v125 = vpack.c.b16 %v107, %v105
    %v126 = vpack.c.b16 %v108, %v106
    %v127 = vpack.c.b16 %v111, %v109
    %v128 = vpack.c.b16 %v112, %v110
    %v129 = vpack.c.b16 %v115, %v113
    %v130 = vpack.c.b16 %v116, %v114
    %v131 = vpack.c.b16 %v119, %v117
    %v132 = vpack.c.b16 %v120, %v118
    %vm143 = vcmask 728064
    %v145 = vsel %vm143, %v66, 0
    %vm147 = vcmask 1043456
    %vm148 = vcmask 1044480
    %v149 = vsel %vm147, 4294967295, 65535
    %v150 = vsel %vm148, %v149, 0
    %v152 = vand.u32 %v131, %v150
    %v155 = vand.u32 %v132, %v150
    %157 = vmatpush.bf16.msra.mxu0 0
    %158 = vmatpush.bf16.msra.mxu0 0
    %159 = vmatpush.bf16.msra.mxu0 %v152
    %160 = vmatpush.bf16.msra.mxu0 %v129
    %161 = vmatpush.bf16.msra.mxu0 %v127
    %162 = vmatpush.bf16.msra.mxu0 %v125
    %163 = vmatpush.bf16.msra.mxu0 %v123
    %164 = vmatpush.bf16.msra.mxu0 %v121
    %165 = vmatmul.bf16.gmra.mxu0 %v145
    %v166 = vpop.f32.mrf.mxu0
    %v167 = vadd.f32 %v81, %v166
    %v168 = vpop.f32.mrf.mxu0
    %169 = vdwg.mxu0
    %170 = vmatpush.bf16.msra.mxu0 0
    %171 = vmatpush.bf16.msra.mxu0 0
    %172 = vmatpush.bf16.msra.mxu0 %v155
    %173 = vmatpush.bf16.msra.mxu0 %v130
    %174 = vmatpush.bf16.msra.mxu0 %v128
    %175 = vmatpush.bf16.msra.mxu0 %v126
    %176 = vmatpush.bf16.msra.mxu0 %v124
    %177 = vmatpush.bf16.msra.mxu0 %v122
    %178 = vmatmul.bf16.gmra.mxu0 %v145
    %v179 = vpop.f32.mrf.mxu0
    %v180 = vadd.f32 %v82, %v179
    %v181 = vpop.f32.mrf.mxu0
    %182 = vdwg.mxu0
    %v183 = vmax.f32 %v167, 0.0
    %v184 = vmax.f32 %v180, 0.0
    %v185 = vpack.c.bf16 %v183, %v183
    %v186 = vpack.c.bf16 %v184, %v184
    %v187 = vld [vmem:[#allocation5] sm:$0xf]
    %v188 = vld [vmem:[#allocation5 + $0x4] sm:$0xf]
    %v189 = vld [vmem:[#allocation5 + $0x8] sm:$0xf]
    %v190 = vld [vmem:[#allocation5 + $0xc] sm:$0xf]
    %v191 = vld [vmem:[#allocation5 + $0x10] sm:$0xf]
    %v192 = vld [vmem:[#allocation5 + $0x14] sm:$0xf]
    %v193 = vld [vmem:[#allocation5 + $0x18] sm:$0xf]
    %v194 = vld [vmem:[#allocation5 + $0x1c] sm:$0xf]
    %v195 = vld [vmem:[#allocation5 + $0x20] sm:$0xf]
    %v196 = vld [vmem:[#allocation5 + $0x24] sm:$0xf]
    %v197 = vld [vmem:[#allocation5 + $0x28] sm:$0xf]
    %v198 = vld [vmem:[#allocation5 + $0x2c] sm:$0xf]
    %v199 = vld [vmem:[#allocation5 + $0x30] sm:$0xf]
    %v200 = vld [vmem:[#allocation5 + $0x34] sm:$0xf]
    %v201 = vld [vmem:[#allocation5 + $0x38] sm:$0xf]
    %v202 = vld [vmem:[#allocation5 + $0x3c] sm:$0xf]
    %v203 = vld [vmem:[#allocation5 + $0x40] sm:$0xf]
    %v204 = vld [vmem:[#allocation5 + $0x44] sm:$0xf]
    %v205 = vld [vmem:[#allocation5 + $0x48] sm:$0xf]
    %v206 = vld [vmem:[#allocation5 + $0x4c] sm:$0xf]
    %v207 = vld [vmem:[#allocation5 + $0x50] sm:$0xf]
    %v208 = vld [vmem:[#allocation5 + $0x54] sm:$0xf]
    %v209 = vld [vmem:[#allocation5 + $0x58] sm:$0xf]
    %v210 = vld [vmem:[#allocation5 + $0x5c] sm:$0xf]
    %v211 = vld [vmem:[#allocation5 + $0x60] sm:$0xf]
    %v212 = vld [vmem:[#allocation5 + $0x64] sm:$0xf]
    %v213 = vld [vmem:[#allocation5 + $0x68] sm:$0xf]
    %v214 = vld [vmem:[#allocation5 + $0x6c] sm:$0xf]
    %v215 = vld [vmem:[#allocation5 + $0x70] sm:$0xf]
    %v216 = vld [vmem:[#allocation5 + $0x74] sm:$0xf]
    %v217 = vld [vmem:[#allocation5 + $0x78] sm:$0xf]
    %v218 = vld [vmem:[#allocation5 + $0x7c] sm:$0xf]
    %v219 = vld [vmem:[%s4] sm:$0x1]
    %v221 = vperm.slane %v219, 0
    %v255 = vunpack.c.l.b16 %v187
    %v256 = vunpack.c.l.b16 %v188
    %v257 = vunpack.c.l.b16 %v189
    %v258 = vunpack.c.l.b16 %v190
    %v259 = vunpack.c.l.b16 %v191
    %v260 = vunpack.c.l.b16 %v192
    %v261 = vunpack.c.l.b16 %v193
    %v262 = vunpack.c.l.b16 %v194
    %v263 = vunpack.c.l.b16 %v195
    %v264 = vunpack.c.l.b16 %v196
    %v265 = vunpack.c.l.b16 %v197
    %v266 = vunpack.c.l.b16 %v198
    %v267 = vunpack.c.l.b16 %v199
    %v268 = vunpack.c.l.b16 %v200
    %v269 = vunpack.c.l.b16 %v201
    %v270 = vunpack.c.l.b16 %v202
    %v271 = vunpack.c.l.b16 %v203
    %v272 = vunpack.c.l.b16 %v204
    %v273 = vunpack.c.l.b16 %v205
    %v274 = vunpack.c.l.b16 %v206
    %v275 = vunpack.c.l.b16 %v207
    %v276 = vunpack.c.l.b16 %v208
    %v277 = vunpack.c.l.b16 %v209
    %v278 = vunpack.c.l.b16 %v210
    %v279 = vunpack.c.l.b16 %v211
    %v280 = vunpack.c.l.b16 %v212
    %v281 = vunpack.c.l.b16 %v213
    %v282 = vunpack.c.l.b16 %v214
    %v283 = vunpack.c.l.b16 %v215
    %v284 = vunpack.c.l.b16 %v216
    %v285 = vunpack.c.l.b16 %v217
    %v286 = vunpack.c.l.b16 %v218
    %v287 = vpack.c.b16 %v256, %v255
    %v288 = vpack.c.b16 %v258, %v257
    %v289 = vpack.c.b16 %v260, %v259
    %v290 = vpack.c.b16 %v262, %v261
    %v291 = vpack.c.b16 %v264, %v263
    %v292 = vpack.c.b16 %v266, %v265
    %v293 = vpack.c.b16 %v268, %v267
    %v294 = vpack.c.b16 %v270, %v269
    %v295 = vpack.c.b16 %v272, %v271
    %v296 = vpack.c.b16 %v274, %v273
    %v297 = vpack.c.b16 %v276, %v275
    %v298 = vpack.c.b16 %v278, %v277
    %v299 = vpack.c.b16 %v280, %v279
    %v300 = vpack.c.b16 %v282, %v281
    %v301 = vpack.c.b16 %v284, %v283
    %v302 = vpack.c.b16 %v286, %v285
    %319 = vmatpush.bf16.msra.mxu0 %v294
    %320 = vmatpush.bf16.msra.mxu0 %v293
    %321 = vmatpush.bf16.msra.mxu0 %v292
    %322 = vmatpush.bf16.msra.mxu0 %v291
    %323 = vmatpush.bf16.msra.mxu0 %v290
    %324 = vmatpush.bf16.msra.mxu0 %v289
    %325 = vmatpush.bf16.msra.mxu0 %v288
    %326 = vmatpush.bf16.msra.mxu0 %v287
    %327 = vmatmul.bf16.gmra.mxu0 %v185
    %v328 = vpop.f32.mrf.mxu0
    %v329 = vadd.f32 %v221, %v328
    %v330 = vpop.f32.mrf.mxu0
    %331 = vdwg.mxu0
    %332 = vmatpush.bf16.msra.mxu0 %v302
    %333 = vmatpush.bf16.msra.mxu0 %v301
    %334 = vmatpush.bf16.msra.mxu0 %v300
    %335 = vmatpush.bf16.msra.mxu0 %v299
    %336 = vmatpush.bf16.msra.mxu0 %v298
    %337 = vmatpush.bf16.msra.mxu0 %v297
    %338 = vmatpush.bf16.msra.mxu0 %v296
    %339 = vmatpush.bf16.msra.mxu0 %v295
    %340 = vmatmul.bf16.gmra.mxu0 %v186
    %v341 = vpop.f32.mrf.mxu0
    %v342 = vadd.f32 %v329, %v341
    %v343 = vpop.f32.mrf.mxu0
    %344 = vdwg.mxu0
    %v345 = vmax.f32 %v342, 0.0
    %v346 = vpack.c.bf16 %v345, %v345
    %v347 = vld [vmem:[%s5] sm:$0xf]
    %v348 = vld [vmem:[%s5 + $0x4] sm:$0xf]
    %v349 = vld [vmem:[%s5 + $0x8] sm:$0xf]
    %v350 = vld [vmem:[%s5 + $0xc] sm:$0xf]
    %v351 = vld [vmem:[%s5 + $0x10] sm:$0xf]
    %v352 = vld [vmem:[%s5 + $0x14] sm:$0xf]
    %v353 = vld [vmem:[%s5 + $0x18] sm:$0xf]
    %v354 = vld [vmem:[%s5 + $0x1c] sm:$0xf]
    %v355 = vld [vmem:[%s5 + $0x20] sm:$0xf]
    %v356 = vld [vmem:[%s5 + $0x24] sm:$0xf]
    %v357 = vld [vmem:[%s5 + $0x28] sm:$0xf]
    %v358 = vld [vmem:[%s5 + $0x2c] sm:$0xf]
    %v359 = vld [vmem:[%s5 + $0x30] sm:$0xf]
    %v360 = vld [vmem:[%s5 + $0x34] sm:$0xf]
    %v361 = vld [vmem:[%s5 + $0x38] sm:$0xf]
    %v362 = vld [vmem:[%s5 + $0x3c] sm:$0xf]
    %v363 = vld [vmem:[%s6] sm:$0x1]
    %v365 = vperm.slane %v363, 0
    %v383 = vunpack.c.l.b16 %v347
    %v384 = vunpack.c.l.b16 %v348
    %v385 = vunpack.c.l.b16 %v349
    %v386 = vunpack.c.l.b16 %v350
    %v387 = vunpack.c.l.b16 %v351
    %v388 = vunpack.c.l.b16 %v352
    %v389 = vunpack.c.l.b16 %v353
    %v390 = vunpack.c.l.b16 %v354
    %v391 = vunpack.c.l.b16 %v355
    %v392 = vunpack.c.l.b16 %v356
    %v393 = vunpack.c.l.b16 %v357
    %v394 = vunpack.c.l.b16 %v358
    %v395 = vunpack.c.l.b16 %v359
    %v396 = vunpack.c.l.b16 %v360
    %v397 = vunpack.c.l.b16 %v361
    %v398 = vunpack.c.l.b16 %v362
    %v399 = vpack.c.b16 %v384, %v383
    %v400 = vpack.c.b16 %v386, %v385
    %v401 = vpack.c.b16 %v388, %v387
    %v402 = vpack.c.b16 %v390, %v389
    %v403 = vpack.c.b16 %v392, %v391
    %v404 = vpack.c.b16 %v394, %v393
    %v405 = vpack.c.b16 %v396, %v395
    %v406 = vpack.c.b16 %v398, %v397
    %415 = vmatpush.bf16.msra.mxu0 %v406
    %416 = vmatpush.bf16.msra.mxu0 %v405
    %417 = vmatpush.bf16.msra.mxu0 %v404
    %418 = vmatpush.bf16.msra.mxu0 %v403
    %419 = vmatpush.bf16.msra.mxu0 %v402
    %420 = vmatpush.bf16.msra.mxu0 %v401
    %421 = vmatpush.bf16.msra.mxu0 %v400
    %422 = vmatpush.bf16.msra.mxu0 %v399
    %423 = vmatmul.bf16.gmra.mxu0 %v346
    %v424 = vpop.f32.mrf.mxu0
    %v425 = vadd.f32 %v365, %v424
    %v426 = vpop.f32.mrf.mxu0
    %427 = vdwg.mxu0
    %v428 = vmax.f32 %v425, 0.0
    %v429 = vpack.c.bf16 %v428, %v428
    %v430 = vld [vmem:[%s7] sm:$0xf]
    %v431 = vld [vmem:[%s7 + $0x4] sm:$0xf]
    %v432 = vld [vmem:[%s7 + $0x8] sm:$0xf]
    %v433 = vld [vmem:[%s7 + $0xc] sm:$0xf]
    %v434 = vld [vmem:[%s7 + $0x10] sm:$0xf]
    %v435 = vld [vmem:[%s7 + $0x14] sm:$0xf]
    %v436 = vld [vmem:[%s7 + $0x18] sm:$0xf]
    %v437 = vld [vmem:[%s7 + $0x1c] sm:$0xf]
    %v438 = vld [vmem:[#allocation2] sm:$0x1]
    %v440 = vperm.slane %v438, 0
    %v450 = vunpack.c.l.b16 %v430
    %v451 = vunpack.c.l.b16 %v431
    %v452 = vunpack.c.l.b16 %v432
    %v453 = vunpack.c.l.b16 %v433
    %v454 = vunpack.c.l.b16 %v434
    %v455 = vunpack.c.l.b16 %v435
    %v456 = vunpack.c.l.b16 %v436
    %v457 = vunpack.c.l.b16 %v437
    %v458 = vpack.c.b16 %v451, %v450
    %v459 = vpack.c.b16 %v453, %v452
    %v460 = vpack.c.b16 %v455, %v454
    %v461 = vpack.c.b16 %v457, %v456
    %vm466 = vcmask 523264
    %v468 = vsel %vm466, %v429, 0
    %470 = vmatpush.bf16.msra.mxu0 0
    %471 = vmatpush.bf16.msra.mxu0 0
    %472 = vmatpush.bf16.msra.mxu0 0
    %473 = vmatpush.bf16.msra.mxu0 0
    %474 = vmatpush.bf16.msra.mxu0 %v461
    %475 = vmatpush.bf16.msra.mxu0 %v460
    %476 = vmatpush.bf16.msra.mxu0 %v459
    %477 = vmatpush.bf16.msra.mxu0 %v458
    %478 = vmatmul.bf16.gmra.mxu0 %v468
    %v479 = vpop.f32.mrf.mxu0
    %v480 = vadd.f32 %v440, %v479
    %v481 = vpop.f32.mrf.mxu0
    %482 = vdwg.mxu0
    %v483 = vxor.u32 %v480, 2147483648
    %v484 = vmul.f32 %v483, 1.442695
    %v485 = vpow.pop %v484
    %v486 = vadd.f32 %v485, 1.0
    %v487 = vrcp.pop %v486
    %v488 = vmul.f32 %v486, %v487
    %v489 = vsub.f32 1.0, %v488
    %v490 = vmul.f32 %v487, %v489
    %v491 = vadd.f32 %v487, %v490
    %vm492 = vweird.f32 %v486
    %vm493 = vweird.f32 %v487
    %vm494 = vmor %vm492, %vm493
    %v495 = vsel %vm494, %v487, %v491
    %v496 = vand.u32 2147483647, %v486
    %vm497 = vcmp.eq.f32.partialorder %v496, 8.507059e+37
    %v498 = vand.u32 %v486, 2147483648
    %v499 = vor.u32 1.1754944e-38, %v498
    %v500 = vsel %vm497, %v499, %v495
    %v501 = vmul.f32 1.0, %v500
    %vm502 = vcmask 7168
    %503 = vst.msk [vmem:[%s9] sm:$0xff] %vm502, %v501
    // Predicated region
    $region46: #{network_anomaly_forward.1} parent=1 // pred_check
      _
    $region47: #{network_anomaly_forward.1} parent=1 // pred_check_branch
      %505 = sbr.rel (0) target = $region49
    $region48: #{network_anomaly_forward.1} parent=1 // pred_region
      _
    $region49: #{network_anomaly_forward.1} parent=1 // pred_fallthru
      _
    // Predicated region
    $region50: #{network_anomaly_forward.1} parent=1 // pred_check
      _
    $region51: #{network_anomaly_forward.1} parent=1 // pred_check_branch
      %507 = sbr.rel (0) target = $region53
    $region52: #{network_anomaly_forward.1} parent=1 // pred_region
      _
    $region53: #{network_anomaly_forward.1} parent=1 // pred_fallthru
      _
    %508 = vsyncpa [#allocation4], 1
    %509 = vsyncpa [#allocation6], 1

</llo_original>
